<compile_context>
chip_gen: v7x
topology: tpu7x:2x2x1
jax: 0.10.0
libtpu: 0.0.40
codegen_flags: <defaults>
</compile_context>

<pallas_src>
import math

import jax
import jax.numpy as jnp
from jax.experimental import pallas as pl
from jax.experimental.pallas import tpu as pltpu


MAX_TILE_M = 4096                      # rows per block cap (2 MiB/stream at 512 B rows)
VMEM_BUDGET_BYTES = 32 * 1024 * 1024   # target double-buffered working set (fits v5e..v7x)


def _round_up(x: int, m: int) -> int:
    return ((x + m - 1) // m) * m


def _round_down(x: int, m: int) -> int:
    return (x // m) * m


def _choose_tile_m(M: int, bytes_per_row_all_streams: int, resident_bytes: int = 0,
                   max_tile_m: int = MAX_TILE_M, min_grid: int = 2) -> int:
    """Row tile: multiple of 8 (or == M), sized to the VMEM budget, and split into
    >= min_grid grid steps when M allows (lets the parallel axis use both v7x TCs)."""
    if M <= 8:
        return M
    budget = max(VMEM_BUDGET_BYTES - resident_bytes, 1 << 20)
    cap = max(budget // (2 * bytes_per_row_all_streams), 8)   # 2x = double buffering
    tile = min(_round_down(cap, 8), max_tile_m, _round_up(M, 8))
    tile = max(tile, 8)
    while pl.cdiv(M, tile) < min_grid and tile > 8:
        tile = max(_round_down(tile // 2, 8), 8)
    return tile


def _vmem_limit(need_bytes: int) -> int:
    return int(min(need_bytes + (16 << 20), 48 << 20))


# ---------------------------------------------------------------------------
# Elementwise rotation kernels (unitary operator == scaled identity).
# coef_ref is an SMEM [2] f32 array holding (a, b) with op_real = a*I, op_imag = b*I.
# Inputs stream in native dtype, math in f32, outputs written back in native dtype.
# ---------------------------------------------------------------------------
def _rotate2_kernel(coef_ref, sr_ref, si_ref, or_ref, oi_ref):
    a = coef_ref[0]
    b = coef_ref[1]
    sr = sr_ref[...].astype(jnp.float32)
    si = si_ref[...].astype(jnp.float32)
    or_ref[...] = (a * sr - b * si).astype(or_ref.dtype)
    oi_ref[...] = (b * sr + a * si).astype(oi_ref.dtype)


def _rotate1_kernel(coef_ref, sr_ref, or_ref, oi_ref):
    a = coef_ref[0]
    b = coef_ref[1]
    sr = sr_ref[...].astype(jnp.float32)
    or_ref[...] = (a * sr).astype(or_ref.dtype)
    oi_ref[...] = (b * sr).astype(oi_ref.dtype)


def unitary_rotate_pallas(coef, state_real, state_imag=None):
    """coef: [2] f32 = (a, b). Returns (out_real, out_imag) with state's shape/dtype."""
    orig_shape = state_real.shape
    out_dtype = state_real.dtype
    Q = orig_shape[-1]
    M = state_real.size // Q
    sr = state_real.reshape(M, Q)          # merge leading dims only (layout-preserving)

    itemsize = jnp.dtype(out_dtype).itemsize
    n_streams = (2 if state_imag is not None else 1) + 2
    tile_m = _choose_tile_m(M, n_streams * Q * itemsize)
    grid = (pl.cdiv(M, tile_m),)

    coef_spec = pl.BlockSpec(memory_space=pltpu.MemorySpace.SMEM)
    tile_spec = pl.BlockSpec((tile_m, Q), lambda i: (i, 0))
    out_shape = (jax.ShapeDtypeStruct((M, Q), out_dtype),
                 jax.ShapeDtypeStruct((M, Q), out_dtype))
    need = 2 * n_streams * tile_m * Q * itemsize
    cparams = pltpu.CompilerParams(dimension_semantics=("parallel",),
                                   vmem_limit_bytes=_vmem_limit(need))

    if state_imag is None:
        out_r, out_i = pl.pallas_call(
            _rotate1_kernel, out_shape=out_shape, grid=grid,
            in_specs=[coef_spec, tile_spec],
            out_specs=(tile_spec, tile_spec),
            compiler_params=cparams,
        )(coef, sr)
    else:
        si = state_imag.reshape(M, Q)
        out_r, out_i = pl.pallas_call(
            _rotate2_kernel, out_shape=out_shape, grid=grid,
            in_specs=[coef_spec, tile_spec, tile_spec],
            out_specs=(tile_spec, tile_spec),
            compiler_params=cparams,
        )(coef, sr, si)

    return out_r.reshape(orig_shape), out_i.reshape(orig_shape)


# ---------------------------------------------------------------------------
# General fallback: matmul against [Q, Q] operator matrices (MXU).
# Operators are whole-array VMEM residents; state tiles over M.
# Specialized variants avoid dead matmuls.
# ---------------------------------------------------------------------------
def _cmm_complex_kernel(sr_ref, si_ref, opr_ref, opi_ref, ops_ref, or_ref, oi_ref):
    # 3-matmul Karatsuba complex product: ops = opr + opi precomputed at trace time.
    sr = sr_ref[...].astype(jnp.float32)
    si = si_ref[...].astype(jnp.float32)
    t1 = jnp.dot(sr, opr_ref[...], preferred_element_type=jnp.float32)
    t2 = jnp.dot(si, opi_ref[...], preferred_element_type=jnp.float32)
    t3 = jnp.dot(sr + si, ops_ref[...], preferred_element_type=jnp.float32)
    or_ref[...] = (t1 - t2).astype(or_ref.dtype)
    oi_ref[...] = (t3 - t1 - t2).astype(oi_ref.dtype)


def _cmm_zero_imag_op_kernel(sr_ref, si_ref, opr_ref, or_ref, oi_ref):
    # op_imag statically zero: out_r = sr@opr, out_i = si@opr (2 dots).
    opr = opr_ref[...]
    or_ref[...] = jnp.dot(sr_ref[...].astype(jnp.float32), opr,
                          preferred_element_type=jnp.float32).astype(or_ref.dtype)
    oi_ref[...] = jnp.dot(si_ref[...].astype(jnp.float32), opr,
                          preferred_element_type=jnp.float32).astype(oi_ref.dtype)


def _cmm_real_state_kernel(sr_ref, opr_ref, opi_ref, or_ref, oi_ref):
    # real-only state: out_r = sr@opr, out_i = sr@opi (2 dots).
    sr = sr_ref[...].astype(jnp.float32)
    or_ref[...] = jnp.dot(sr, opr_ref[...],
                          preferred_element_type=jnp.float32).astype(or_ref.dtype)
    oi_ref[...] = jnp.dot(sr, opi_ref[...],
                          preferred_element_type=jnp.float32).astype(oi_ref.dtype)


def _cmm_real_state_zero_imag_op_kernel(sr_ref, opr_ref, or_ref, oi_ref):
    # real-only state, zero imag operator: 1 dot, imag output is exactly zero.
    sr = sr_ref[...].astype(jnp.float32)
    or_ref[...] = jnp.dot(sr, opr_ref[...],
                          preferred_element_type=jnp.float32).astype(or_ref.dtype)
    oi_ref[...] = jnp.zeros_like(oi_ref)


def complex_matmul_pallas(state_real, state_imag, op_real, op_imag):
    """state_*: [..., Q] (imag may be None); op_real: [Q,Q] f32; op_imag: [Q,Q] f32
    or None when statically zero. Returns (out_real, out_imag) in the state dtype."""
    # TODO(synk): no N/K tiling of the [Q,Q] operators; for very large Q on v7x
    # (64 MiB VMEM) an extra grid axis with an f32 accumulator would be needed.
    orig_shape = state_real.shape
    out_dtype = state_real.dtype
    Q = orig_shape[-1]
    M = state_real.size // Q
    sr = state_real.reshape(M, Q)
    si = None if state_imag is None else state_imag.reshape(M, Q)

    itemsize = jnp.dtype(out_dtype).itemsize
    has_imag = si is not None
    n_streams = (2 if has_imag else 1) + 2
    if has_imag and op_imag is not None:
        n_ops = 3
    elif op_imag is not None:
        n_ops = 2
    else:
        n_ops = 1
    resident = n_ops * Q * Q * 4
    tile_m = _choose_tile_m(M, n_streams * Q * itemsize, resident_bytes=resident)
    grid = (pl.cdiv(M, tile_m),)

    state_spec = pl.BlockSpec((tile_m, Q), lambda i: (i, 0))
    op_spec = pl.BlockSpec(memory_space=pltpu.MemorySpace.VMEM)   # whole-array, single-buffered
    out_shape = (jax.ShapeDtypeStruct((M, Q), out_dtype),
                 jax.ShapeDtypeStruct((M, Q), out_dtype))
    need = 2 * n_streams * tile_m * Q * itemsize + resident
    cparams = pltpu.CompilerParams(dimension_semantics=("parallel",),
                                   vmem_limit_bytes=_vmem_limit(need))

    if has_imag and op_imag is not None:
        op_sum = (op_real + op_imag).astype(jnp.float32)
        out_r, out_i = pl.pallas_call(
            _cmm_complex_kernel, out_shape=out_shape, grid=grid,
            in_specs=[state_spec, state_spec, op_spec, op_spec, op_spec],
            out_specs=(state_spec, state_spec), compiler_params=cparams,
        )(sr, si, op_real, op_imag, op_sum)
    elif has_imag:
        out_r, out_i = pl.pallas_call(
            _cmm_zero_imag_op_kernel, out_shape=out_shape, grid=grid,
            in_specs=[state_spec, state_spec, op_spec],
            out_specs=(state_spec, state_spec), compiler_params=cparams,
        )(sr, si, op_real)
    elif op_imag is not None:
        out_r, out_i = pl.pallas_call(
            _cmm_real_state_kernel, out_shape=out_shape, grid=grid,
            in_specs=[state_spec, op_spec, op_spec],
            out_specs=(state_spec, state_spec), compiler_params=cparams,
        )(sr, op_real, op_imag)
    else:
        out_r, out_i = pl.pallas_call(
            _cmm_real_state_zero_imag_op_kernel, out_shape=out_shape, grid=grid,
            in_specs=[state_spec, op_spec],
            out_specs=(state_spec, state_spec), compiler_params=cparams,
        )(sr, op_real)

    return out_r.reshape(orig_shape), out_i.reshape(orig_shape)


# ---------------------------------------------------------------------------
# QuantumOperator (JAX / Pallas version)
# ---------------------------------------------------------------------------
class QuantumOperatorPallas:
    def __init__(self, quantum_dim: int, operator_type: str = "unitary",
                 num_params: int = 4, key=None):
        if key is None:
            key = jax.random.PRNGKey(0)
        k_p, k_r, k_i = jax.random.split(key, 3)
        self.quantum_dim = quantum_dim
        self.operator_type = operator_type
        self.num_params = num_params
        # synthetic parameters (mirrors torch.randn(num_params))
        self.params = jax.random.normal(k_p, (num_params,), dtype=jnp.float32)
        if operator_type == "custom":
            # orthogonal init (mirrors nn.init.orthogonal_)
            q_r, _ = jnp.linalg.qr(jax.random.normal(k_r, (quantum_dim, quantum_dim),
                                                     dtype=jnp.float32))
            q_i, _ = jnp.linalg.qr(jax.random.normal(k_i, (quantum_dim, quantum_dim),
                                                     dtype=jnp.float32))
            self.operator_real = q_r
            self.operator_imag = q_i
            self._operator_imag_is_zero = False
        else:
            self.operator_real = jnp.eye(quantum_dim, dtype=jnp.float32)
            self.operator_imag = jnp.zeros((quantum_dim, quantum_dim), dtype=jnp.float32)
            self._operator_imag_is_zero = True
        # TODO(synk): 'hermitian' and 'projection' operator-matrix construction
        # (entrywise Python loops) not ported; those types fall back to the
        # identity/zero buffer matrices like unknown types in the torch module.

    # (a, b) such that op_real = eye * a, op_imag = eye * b
    def _unitary_coefficients(self):
        theta = self.params[0] * math.pi
        phi = self.params[1] * math.pi
        a = jnp.cos(theta) * jnp.cos(phi)
        b = jnp.sin(theta) * jnp.sin(phi)
        return jnp.stack([a, b]).astype(jnp.float32)

    def get_operator_matrices(self):
        if self.operator_type == "unitary":
            coef = self._unitary_coefficients()
            eye = jnp.eye(self.quantum_dim, dtype=jnp.float32)
            return eye * coef[0], eye * coef[1]
        return self.operator_real, self.operator_imag

    def apply_operator(self, state_real, state_imag=None):
        if self.operator_type == "unitary":
            # Scaled-identity operator => pure streaming VPU rotation
            # (no [Q,Q] matrices materialized or DMA'd, no MXU).
            coef = self._unitary_coefficients()
            return unitary_rotate_pallas(coef, state_real, state_imag)

        op_real, op_imag = self.get_operator_matrices()
        op_imag_arg = None if self._operator_imag_is_zero else op_imag
        return complex_matmul_pallas(state_real, state_imag, op_real, op_imag_arg)

    def __call__(self, state_dict):
        state_real = state_dict["real"]
        state_imag = state_dict.get("imag")
        output_real, output_imag = self.apply_operator(state_real, state_imag)
        results = {"real": output_real, "phases": state_dict.get("phases")}
        if output_imag is not None:
            results["imag"] = output_imag
        return results


# ---------------------------------------------------------------------------
# Reference (pure JAX) — mirrors the torch module's apply_operator exactly.
# ---------------------------------------------------------------------------
def _reference_forward(op: QuantumOperatorPallas, state_real, state_imag):
    op_real, op_imag = op.get_operator_matrices()
    sr = state_real.astype(jnp.float32)
    if state_imag is None:
        return sr @ op_real, sr @ op_imag
    si = state_imag.astype(jnp.float32)
    return sr @ op_real - si @ op_imag, sr @ op_imag + si @ op_real


def _check(out, ref_r, ref_i, tol=1e-4):
    jax.block_until_ready(out["real"])
    jax.block_until_ready(out["imag"])
    assert jnp.allclose(out["real"], ref_r, atol=tol, rtol=tol)
    assert jnp.allclose(out["imag"], ref_i, atol=tol, rtol=tol)


if __name__ == "__main__":
    key = jax.random.PRNGKey(0)
    k_param, k_real, k_imag, k_phase = jax.random.split(key, 4)

    batch, seq, quantum_dim = 2, 8, 32

    state_real = jax.random.normal(k_real, (batch, seq, quantum_dim), dtype=jnp.float32)
    state_imag = jax.random.normal(k_imag, (batch, seq, quantum_dim), dtype=jnp.float32)
    phases = jax.random.normal(k_phase, (batch, seq, quantum_dim), dtype=jnp.float32)

    # --- 1. unitary operator, complex state (hot path: streaming VPU rotation) ---
    op_u = QuantumOperatorPallas(quantum_dim, operator_type="unitary",
                                 num_params=4, key=k_param)
    out1 = op_u({"real": state_real, "imag": state_imag, "phases": phases})
    ref_r, ref_i = _reference_forward(op_u, state_real, state_imag)
    _check(out1, ref_r, ref_i)
    assert out1["phases"] is phases

    # --- 2. unitary operator, real-only state (1-input rotation, no dead work) ---
    out2 = op_u({"real": state_real, "phases": phases})
    ref_r2, ref_i2 = _reference_forward(op_u, state_real, None)
    _check(out2, ref_r2, ref_i2)

    # --- 3. generic fallback (identity/zero buffers), complex state: 2-dot path ---
    op_g = QuantumOperatorPallas(quantum_dim, operator_type="generic",
                                 num_params=4, key=k_param)
    out3 = op_g({"real": state_real, "imag": state_imag, "phases": phases})
    ref_r3, ref_i3 = _reference_forward(op_g, state_real, state_imag)
    _check(out3, ref_r3, ref_i3)

    # --- 4. generic fallback, real-only state: 1-dot path ---
    out4 = op_g({"real": state_real, "phases": phases})
    ref_r4, ref_i4 = _reference_forward(op_g, state_real, None)
    _check(out4, ref_r4, ref_i4)

    # --- 5. custom operator (learned complex matrices): 3-matmul Karatsuba path ---
    op_c = QuantumOperatorPallas(quantum_dim, operator_type="custom",
                                 num_params=4, key=k_param)
    out5 = op_c({"real": state_real, "imag": state_imag, "phases": phases})
    ref_r5, ref_i5 = _reference_forward(op_c, state_real, state_imag)
    _check(out5, ref_r5, ref_i5)

    print("KERNEL_OK")
</pallas_src>

<mosaic_0001>
module attributes {stable_mosaic.version = 11 : i64} {
  func.func @_rotate2_kernel(%arg0: i32, %arg1: memref<2xf32, #tpu.memory_space<smem>>, %arg2: memref<8x32xf32, #tpu.memory_space<vmem>>, %arg3: memref<8x32xf32, #tpu.memory_space<vmem>>, %arg4: memref<8x32xf32, #tpu.memory_space<vmem>>, %arg5: memref<8x32xf32, #tpu.memory_space<vmem>>) attributes {dimension_semantics = [#tpu.dimension_semantics<parallel>], iteration_bounds = array<i64: 2>, scalar_prefetch = 0 : i64, scratch_operands = 0 : i64, tpu.core_type = #tpu.core_type<tc>, window_params = [{transform_indices = @transform_0, window_bounds = array<i64: 2>}, {transform_indices = @transform_1, window_bounds = array<i64: 8, 32>}, {transform_indices = @transform_2, window_bounds = array<i64: 8, 32>}, {transform_indices = @transform_3, window_bounds = array<i64: 8, 32>}, {transform_indices = @transform_4, window_bounds = array<i64: 8, 32>}]} {
    %c0 = arith.constant 0 : index
    %0 = memref.load %arg1[%c0] : memref<2xf32, #tpu.memory_space<smem>>
    %c1 = arith.constant 1 : index
    %1 = memref.load %arg1[%c1] : memref<2xf32, #tpu.memory_space<smem>>
    %c0_0 = arith.constant 0 : index
    %c0_1 = arith.constant 0 : index
    %2 = vector.load %arg2[%c0_0, %c0_1] : memref<8x32xf32, #tpu.memory_space<vmem>>, vector<8x32xf32>
    %c0_2 = arith.constant 0 : index
    %c0_3 = arith.constant 0 : index
    %3 = vector.load %arg3[%c0_2, %c0_3] : memref<8x32xf32, #tpu.memory_space<vmem>>, vector<8x32xf32>
    %4 = vector.broadcast %0 : f32 to vector<8x32xf32>
    %5 = arith.mulf %4, %2 : vector<8x32xf32>
    %6 = vector.broadcast %1 : f32 to vector<8x32xf32>
    %7 = arith.mulf %6, %3 : vector<8x32xf32>
    %8 = arith.subf %5, %7 : vector<8x32xf32>
    %c0_4 = arith.constant 0 : index
    %c0_5 = arith.constant 0 : index
    %9 = vector.load %arg4[%c0_4, %c0_5] : memref<8x32xf32, #tpu.memory_space<vmem>>, vector<8x32xf32>
    tpu.vector_store %arg4[%c0_4, %c0_5], %8 {strides = array<i32>} : memref<8x32xf32, #tpu.memory_space<vmem>>, vector<8x32xf32>,
    %10 = vector.broadcast %1 : f32 to vector<8x32xf32>
    %11 = arith.mulf %10, %2 : vector<8x32xf32>
    %12 = vector.broadcast %0 : f32 to vector<8x32xf32>
    %13 = arith.mulf %12, %3 : vector<8x32xf32>
    %14 = arith.addf %11, %13 : vector<8x32xf32>
    %c0_6 = arith.constant 0 : index
    %c0_7 = arith.constant 0 : index
    %15 = vector.load %arg5[%c0_6, %c0_7] : memref<8x32xf32, #tpu.memory_space<vmem>>, vector<8x32xf32>
    tpu.vector_store %arg5[%c0_6, %c0_7], %14 {strides = array<i32>} : memref<8x32xf32, #tpu.memory_space<vmem>>, vector<8x32xf32>,
    return
  }
  func.func @transform_0(%arg0: i32) -> i32 {
    %c0_i32 = arith.constant 0 : i32
    %c0_i32_0 = arith.constant 0 : i32
    return %c0_i32 : i32
  }
  func.func @transform_1(%arg0: i32) -> (i32, i32) {
    %c0_i32 = arith.constant 0 : i32
    %c0_i32_0 = arith.constant 0 : i32
    return %arg0, %c0_i32 : i32, i32
  }
  func.func @transform_2(%arg0: i32) -> (i32, i32) {
    %c0_i32 = arith.constant 0 : i32
    %c0_i32_0 = arith.constant 0 : i32
    return %arg0, %c0_i32 : i32, i32
  }
  func.func @transform_3(%arg0: i32) -> (i32, i32) {
    %c0_i32 = arith.constant 0 : i32
    %c0_i32_0 = arith.constant 0 : i32
    return %arg0, %c0_i32 : i32, i32
  }
  func.func @transform_4(%arg0: i32) -> (i32, i32) {
    %c0_i32 = arith.constant 0 : i32
    %c0_i32_0 = arith.constant 0 : i32
    return %arg0, %c0_i32 : i32, i32
  }
}

</mosaic_0001>

<llo_original>
// kernel: tpu_custom_call.1
$region0: #{tpu_custom_call.1}
  #allocation0 [shape = 'u32[]', space=smem, size = 0x4, offset = 0x4, fixed_abs, tag = 'smem constant byte address 0x4 - core index']
  #allocation1 [shape = 'u32[144,128]{1,0:T(1,128)}', space=vmem, size = 0x12000, scoped, tag = 'internal scratch']
  %s0 = inlined_call_operand.hbm [shape: f32[2], index: 0, kind: input, shape index: {}]
  %s1 = inlined_call_operand.hbm [shape: f32[16,32], index: 1, kind: input, shape index: {}]
  %s2 = inlined_call_operand.hbm [shape: f32[16,32], index: 2, kind: input, shape index: {}]
  %s3 = inlined_call_operand.hbm [shape: f32[16,32], index: 3, kind: output, shape index: {0}]
  %s4 = inlined_call_operand.hbm [shape: f32[16,32], index: 4, kind: output, shape index: {1}]
  %5 = xla_tuple %s3, %s4
  %s6 = sld [smem:[#allocation0]]
  $region65: #{tpu_custom_call.1} parent=0
    _
  %s8 = ssub.s32 1, %s6
  %s9 = scalar_select 0, %s8, %s6
  $region1: #{tpu_custom_call.1} parent=0
    #allocation2 [shape = 'u8[512]{0}', space=smem, size = 0x200, scoped, tag = 'input window, operand 0, single buffered']
    #allocation3 [shape = 's32[2]{0}', space=sflag, size = 0x8, scoped, tag = 'scoped memory for tpu_custom_call.1']
    #allocation4 [shape = 's32[2]{0}', space=sflag, size = 0x8, scoped, tag = 'scoped memory for tpu_custom_call.1']
    #allocation5 [shape = 's32[2]{0}', space=sflag, size = 0x8, scoped, tag = 'scoped memory for tpu_custom_call.1']
    #allocation6 [shape = 'u8[8192]{0}', space=vmem, size = 0x2000, scoped, tag = 'input window, operand 1']
    #allocation7 [shape = 'u8[8192]{0}', space=vmem, size = 0x2000, scoped, tag = 'input window, operand 2']
    #allocation8 [shape = 's32[2]{0}', space=sflag, size = 0x8, scoped, tag = 'scoped memory for tpu_custom_call.1']
    #allocation9 [shape = 'u8[8192]{0}', space=vmem, size = 0x2000, scoped, tag = 'output window, operand 0']
    #allocation10 [shape = 'u8[8192]{0}', space=vmem, size = 0x2000, scoped, tag = 'output window, operand 1']
    #allocation11 [shape = 's32[2]{0}', space=sflag, size = 0x8, scoped, tag = 'scoped memory for tpu_custom_call.1']
    %10 = vsyncpa [#allocation5], 0
    %11 = vsyncpa [#allocation3], 0
    %s12 = scalar_lea.sflag [#allocation3], 1
    %13 = vsyncpa %s12, 0
    %14 = vsyncpa [#allocation8], 0
    %s15 = scalar_lea.sflag [#allocation8], 1
    %16 = vsyncpa %s15, 0
    %17 = vsyncpa [#allocation4], 0
    %s18 = scalar_lea.sflag [#allocation4], 1
    %19 = vsyncpa %s18, 0
    %20 = vsyncpa [#allocation11], 0
    %s21 = scalar_lea.sflag [#allocation11], 1
    %22 = vsyncpa %s21, 0
    loop: start=0, step=1, limit=4
    $region2: #{tpu_custom_call.1} parent=1 // loop_pre_header
      _
    $region3: #{tpu_custom_call.1} parent=1 // loop_header
      %s24 = sphi 0, %s28
      %p25 = scmp.ge.s32.totalorder %s24, 4
      %s32 = sphi 0, %s32
      %s34 = sphi 0, %s32
      %s35 = sphi 0, %s34
      %s49 = sphi 0, %s35
      %s55 = sphi 0, %s57
      %s58 = sphi 0, %s55
      %s59 = sphi 0, %s58
      %s75 = sphi 0, %s59
      %s81 = sphi 0, %s83
      %s84 = sphi 0, %s81
      %s85 = sphi 0, %s84
      %s101 = sphi 0, %s85
      %s107 = sphi 0, %s109
      %s110 = sphi 0, %s107
      %s111 = sphi 0, %s110
      %s127 = sphi 0, %s111
      %s133 = sphi 0, %s135
      %s136 = sphi 0, %s133
      %s137 = sphi 0, %s136
      %s153 = sphi 0, %s137
    $region4: #{tpu_custom_call.1} parent=1 // loop_header_branch
      %27 = sbr.rel (%p25) target = $region8
    $region5: #{tpu_custom_call.1} parent=1 // loop_body
      %s29 = ssub.s32 %s24, 1
      %s30 = ssub.s32 %s24, 2
      %s31 = sadd.s32 %s24, 1
      %s33 = sadd.s32 %s32, 1
      %p36 = scmp.eq.s32.totalorder %s24, 1
      %p37 = scmp.ne.s32.totalorder %s32, %s34
      %p38 = scmp.eq.s32.totalorder %s24, 0
      %p39 = por %p37, %p38
      %p40 = scmp.ne.s32.totalorder %s32, %s34
      %p41 = scmp.eq.s32.totalorder %s29, 1
      %p42 = por %p40, %p41
      %p43 = scmp.ne.s32.totalorder %s34, %s35
      %p44 = scmp.eq.s32.totalorder %s29, 0
      %p45 = por %p43, %p44
      %p46 = scmp.ne.s32.totalorder %s34, %s35
      %p47 = scmp.eq.s32.totalorder %s30, 1
      %p48 = por %p46, %p47
      %p50 = scmp.ne.s32.totalorder %s35, %s49
      %p51 = scmp.eq.s32.totalorder %s30, 0
      %p52 = por %p50, %p51
      %s53 = ssub.s32 %s24, %s31
      %p54 = scmp.eq.s32.totalorder %s53, 0
      %s56 = sadd.s32 %s55, 1
      %s57 = scalar_select %p54, %s55, %s56
      %p60 = pneg %p54
      %p61 = scmp.eq.s32.totalorder %s24, 1
      %p62 = por %p60, %p61
      %p63 = scmp.ne.s32.totalorder %s55, %s58
      %p64 = scmp.eq.s32.totalorder %s24, 0
      %p65 = por %p63, %p64
      %p66 = scmp.ne.s32.totalorder %s55, %s58
      %p67 = scmp.eq.s32.totalorder %s29, 1
      %p68 = por %p66, %p67
      %p69 = scmp.ne.s32.totalorder %s58, %s59
      %p70 = scmp.eq.s32.totalorder %s29, 0
      %p71 = por %p69, %p70
      %p72 = scmp.ne.s32.totalorder %s58, %s59
      %p73 = scmp.eq.s32.totalorder %s30, 1
      %p74 = por %p72, %p73
      %p76 = scmp.ne.s32.totalorder %s59, %s75
      %p77 = scmp.eq.s32.totalorder %s30, 0
      %p78 = por %p76, %p77
      %s79 = ssub.s32 %s24, %s31
      %p80 = scmp.eq.s32.totalorder %s79, 0
      %s82 = sadd.s32 %s81, 1
      %s83 = scalar_select %p80, %s81, %s82
      %p86 = pneg %p80
      %p87 = scmp.eq.s32.totalorder %s24, 1
      %p88 = por %p86, %p87
      %p89 = scmp.ne.s32.totalorder %s81, %s84
      %p90 = scmp.eq.s32.totalorder %s24, 0
      %p91 = por %p89, %p90
      %p92 = scmp.ne.s32.totalorder %s81, %s84
      %p93 = scmp.eq.s32.totalorder %s29, 1
      %p94 = por %p92, %p93
      %p95 = scmp.ne.s32.totalorder %s84, %s85
      %p96 = scmp.eq.s32.totalorder %s29, 0
      %p97 = por %p95, %p96
      %p98 = scmp.ne.s32.totalorder %s84, %s85
      %p99 = scmp.eq.s32.totalorder %s30, 1
      %p100 = por %p98, %p99
      %p102 = scmp.ne.s32.totalorder %s85, %s101
      %p103 = scmp.eq.s32.totalorder %s30, 0
      %p104 = por %p102, %p103
      %s105 = ssub.s32 %s24, %s31
      %p106 = scmp.eq.s32.totalorder %s105, 0
      %s108 = sadd.s32 %s107, 1
      %s109 = scalar_select %p106, %s107, %s108
      %p112 = pneg %p106
      %p113 = scmp.eq.s32.totalorder %s24, 1
      %p114 = por %p112, %p113
      %p115 = scmp.ne.s32.totalorder %s107, %s110
      %p116 = scmp.eq.s32.totalorder %s24, 0
      %p117 = por %p115, %p116
      %p118 = scmp.ne.s32.totalorder %s107, %s110
      %p119 = scmp.eq.s32.totalorder %s29, 1
      %p120 = por %p118, %p119
      %p121 = scmp.ne.s32.totalorder %s110, %s111
      %p122 = scmp.eq.s32.totalorder %s29, 0
      %p123 = por %p121, %p122
      %p124 = scmp.ne.s32.totalorder %s110, %s111
      %p125 = scmp.eq.s32.totalorder %s30, 1
      %p126 = por %p124, %p125
      %p128 = scmp.ne.s32.totalorder %s111, %s127
      %p129 = scmp.eq.s32.totalorder %s30, 0
      %p130 = por %p128, %p129
      %s131 = ssub.s32 %s24, %s31
      %p132 = scmp.eq.s32.totalorder %s131, 0
      %s134 = sadd.s32 %s133, 1
      %s135 = scalar_select %p132, %s133, %s134
      %p138 = pneg %p132
      %p139 = scmp.eq.s32.totalorder %s24, 1
      %p140 = por %p138, %p139
      %p141 = scmp.ne.s32.totalorder %s133, %s136
      %p142 = scmp.eq.s32.totalorder %s24, 0
      %p143 = por %p141, %p142
      %p144 = scmp.ne.s32.totalorder %s133, %s136
      %p145 = scmp.eq.s32.totalorder %s29, 1
      %p146 = por %p144, %p145
      %p147 = scmp.ne.s32.totalorder %s136, %s137
      %p148 = scmp.eq.s32.totalorder %s29, 0
      %p149 = por %p147, %p148
      %p150 = scmp.ne.s32.totalorder %s136, %s137
      %p151 = scmp.eq.s32.totalorder %s30, 1
      %p152 = por %p150, %p151
      %p154 = scmp.ne.s32.totalorder %s137, %s153
      %p155 = scmp.eq.s32.totalorder %s30, 0
      %p156 = por %p154, %p155
      %p157 = scmp.le.s32.totalorder 1, %s24
      %p158 = scmp.lt.s32.totalorder %s24, 3
      %p159 = pnand %p157, %p158
      %p160 = pneg %p159
      // Predicated region
      $region9: #{tpu_custom_call.1} parent=5 // pred_check
        _
      $region10: #{tpu_custom_call.1} parent=5 // pred_check_branch
        %162 = sbr.rel (%p159) target = $region12
      $region11: #{tpu_custom_call.1} parent=5 // pred_region
        %s163 = ssub.s32 %s24, 1
        // Predicated region
        $region13: #{tpu_custom_call.1} parent=11 // pred_check
          %p164 = pneg %p45
        $region14: #{tpu_custom_call.1} parent=11 // pred_check_branch
          %166 = sbr.rel (%p164) target = $region16
        $region15: #{tpu_custom_call.1} parent=11 // pred_region
          %s168 = ssub.s32 16, 16
          %169 = vsyncadd [#allocation5], %s168
          %172 = dma.hbm_to_smem %s0, 16, [#allocation2], [#allocation5]
        $region16: #{tpu_custom_call.1} parent=11 // pred_fallthru
          _
      $region12: #{tpu_custom_call.1} parent=5 // pred_fallthru
        _
      %p173 = scmp.lt.s32.totalorder %s24, 2
      // Predicated region
      $region17: #{tpu_custom_call.1} parent=5 // pred_check
        %p174 = pneg %p173
      $region18: #{tpu_custom_call.1} parent=5 // pred_check_branch
        %176 = sbr.rel (%p174) target = $region20
      $region19: #{tpu_custom_call.1} parent=5 // pred_region
        // Predicated region
        $region21: #{tpu_custom_call.1} parent=19 // pred_check
          %p177 = pneg %p65
        $region22: #{tpu_custom_call.1} parent=19 // pred_check_branch
          %179 = sbr.rel (%p177) target = $region24
        $region23: #{tpu_custom_call.1} parent=19 // pred_region
          %s180 = sand.u32 %s55, 1
          %s181 = scalar_lea.sflag [#allocation3], %s180
          %s182 = sand.u32 %s55, 1
          %s183 = smul.addr %s182, 8
          %s184 = scalar_lea.vmem [#allocation6], %s183
          %s186 = ssub.s32 128, 128
          %187 = vsyncadd %s181, %s186
          %s188 = smul.addr %s24, 128
          %s189 = scalar_lea.hbm %s1, %s188
          %s191 = sshll.u32 %s184, 4
          %s192 = int_to_ptr.vmem [resolvable:$true] %s191
          %194 = dma.hbm_to_vmem [thread:$0]  %s189, 128, %s192, %s181
        $region24: #{tpu_custom_call.1} parent=19 // pred_fallthru
          _
        // Predicated region
        $region25: #{tpu_custom_call.1} parent=19 // pred_check
          %p195 = pneg %p91
        $region26: #{tpu_custom_call.1} parent=19 // pred_check_branch
          %197 = sbr.rel (%p195) target = $region28
        $region27: #{tpu_custom_call.1} parent=19 // pred_region
          %s198 = sand.u32 %s81, 1
          %s199 = scalar_lea.sflag [#allocation8], %s198
          %s200 = sand.u32 %s81, 1
          %s201 = smul.addr %s200, 8
          %s202 = scalar_lea.vmem [#allocation7], %s201
          %s204 = ssub.s32 128, 128
          %205 = vsyncadd %s199, %s204
          %s206 = smul.addr %s24, 128
          %s207 = scalar_lea.hbm %s2, %s206
          %s209 = sshll.u32 %s202, 4
          %s210 = int_to_ptr.vmem [resolvable:$true] %s209
          %212 = dma.hbm_to_vmem [thread:$0]  %s207, 128, %s210, %s199
        $region28: #{tpu_custom_call.1} parent=19 // pred_fallthru
          _
      $region20: #{tpu_custom_call.1} parent=5 // pred_fallthru
        _
      %p213 = scmp.le.s32.totalorder 1, %s24
      %p214 = scmp.lt.s32.totalorder %s24, 3
      %p215 = pnand %p213, %p214
      %p216 = pneg %p215
      // Predicated region
      $region29: #{tpu_custom_call.1} parent=5 // pred_check
        _
      $region30: #{tpu_custom_call.1} parent=5 // pred_check_branch
        %218 = sbr.rel (%p215) target = $region32
      $region31: #{tpu_custom_call.1} parent=5 // pred_region
        %s219 = ssub.s32 %s24, 1
        // Predicated region
        $region33: #{tpu_custom_call.1} parent=31 // pred_check
          %p220 = pneg %p45
        $region34: #{tpu_custom_call.1} parent=31 // pred_check_branch
          %222 = sbr.rel (%p220) target = $region36
        $region35: #{tpu_custom_call.1} parent=31 // pred_region
          %223 = dma.done [#allocation5], 16
        $region36: #{tpu_custom_call.1} parent=31 // pred_fallthru
          _
        %s224 = sand.u32 %s58, 1
        %s225 = scalar_lea.sflag [#allocation3], %s224
        %s226 = sand.u32 %s58, 1
        %s227 = smul.addr %s226, 8
        %s228 = scalar_lea.vmem [#allocation6], %s227
        // Predicated region
        $region37: #{tpu_custom_call.1} parent=31 // pred_check
          %p229 = pneg %p71
        $region38: #{tpu_custom_call.1} parent=31 // pred_check_branch
          %231 = sbr.rel (%p229) target = $region40
        $region39: #{tpu_custom_call.1} parent=31 // pred_region
          %232 = dma.done %s225, 128
        $region40: #{tpu_custom_call.1} parent=31 // pred_fallthru
          _
        %s233 = sand.u32 %s84, 1
        %s234 = scalar_lea.sflag [#allocation8], %s233
        %s235 = sand.u32 %s84, 1
        %s236 = smul.addr %s235, 8
        %s237 = scalar_lea.vmem [#allocation7], %s236
        // Predicated region
        $region41: #{tpu_custom_call.1} parent=31 // pred_check
          %p238 = pneg %p97
        $region42: #{tpu_custom_call.1} parent=31 // pred_check_branch
          %240 = sbr.rel (%p238) target = $region44
        $region43: #{tpu_custom_call.1} parent=31 // pred_region
          %241 = dma.done %s234, 128
        $region44: #{tpu_custom_call.1} parent=31 // pred_fallthru
          _
        %242 = sfence
        %p243 = pneg %p45
        %p244 = pneg %p42
        %s245 = sand.u32 %s58, 1
        %s246 = scalar_lea.sflag [#allocation3], %s245
        %s247 = sand.u32 %s58, 1
        %s248 = smul.addr %s247, 8
        %s249 = scalar_lea.vmem [#allocation6], %s248
        %p250 = pneg %p71
        %p251 = pneg %p68
        %s252 = sand.u32 %s84, 1
        %s253 = scalar_lea.sflag [#allocation8], %s252
        %s254 = sand.u32 %s84, 1
        %s255 = smul.addr %s254, 8
        %s256 = scalar_lea.vmem [#allocation7], %s255
        %p257 = pneg %p97
        %p258 = pneg %p94
        %p259 = pneg %p123
        %p260 = pneg %p120
        %s261 = sand.u32 %s110, 1
        %s262 = scalar_lea.sflag [#allocation4], %s261
        %s263 = sand.u32 %s110, 1
        %s264 = smul.addr %s263, 8
        %s265 = scalar_lea.vmem [#allocation9], %s264
        %p266 = pneg %p149
        %p267 = pneg %p146
        %s268 = sand.u32 %s136, 1
        %s269 = scalar_lea.sflag [#allocation11], %s268
        %s270 = sand.u32 %s136, 1
        %s271 = smul.addr %s270, 8
        %s272 = scalar_lea.vmem [#allocation10], %s271
        %s273 = sld [smem:[#allocation2]]
        %s274 = sld [smem:[#allocation2 + $0x1]]
        %v275 = vld [vmem:[%s228] sm:$0xff]
        %v276 = vld [vmem:[%s237] sm:$0xff]
        %v277 = vstv %s273
        %v278 = vmul.f32 %v277, %v275
        %v279 = vstv %s274
        %v280 = vmul.f32 %v279, %v276
        %v281 = vsub.f32 %v278, %v280
        %vm282 = vcmask 261120
        %283 = vst.msk [vmem:[%s265] sm:$0xff] %vm282, %v281
        %v284 = vmul.f32 %v279, %v275
        %v285 = vmul.f32 %v277, %v276
        %v286 = vadd.f32 %v284, %v285
        %287 = vst.msk [vmem:[%s272] sm:$0xff] %vm282, %v286
        %s288 = sand.u32 %s110, 1
        %s289 = scalar_lea.sflag [#allocation4], %s288
        %s290 = sand.u32 %s110, 1
        %s291 = smul.addr %s290, 8
        %s292 = scalar_lea.vmem [#allocation9], %s291
        %s293 = sand.u32 %s136, 1
        %s294 = scalar_lea.sflag [#allocation11], %s293
        %s295 = sand.u32 %s136, 1
        %s296 = smul.addr %s295, 8
        %s297 = scalar_lea.vmem [#allocation10], %s296
        // Predicated region
        $region45: #{tpu_custom_call.1} parent=31 // pred_check
          %p298 = pneg %p120
        $region46: #{tpu_custom_call.1} parent=31 // pred_check_branch
          %300 = sbr.rel (%p298) target = $region48
        $region47: #{tpu_custom_call.1} parent=31 // pred_region
          %s302 = ssub.s32 128, 128
          %303 = vsyncadd %s289, %s302
          %s304 = smul.addr %s29, 128
          %s305 = scalar_lea.hbm %s3, %s304
          %s307 = sshll.u32 %s292, 4
          %s308 = int_to_ptr.vmem [resolvable:$true] %s307
          %310 = dma.vmem_to_hbm [thread:$0]  %s308, 128, %s305, %s289
        $region48: #{tpu_custom_call.1} parent=31 // pred_fallthru
          _
        // Predicated region
        $region49: #{tpu_custom_call.1} parent=31 // pred_check
          %p311 = pneg %p146
        $region50: #{tpu_custom_call.1} parent=31 // pred_check_branch
          %313 = sbr.rel (%p311) target = $region52
        $region51: #{tpu_custom_call.1} parent=31 // pred_region
          %s315 = ssub.s32 128, 128
          %316 = vsyncadd %s294, %s315
          %s317 = smul.addr %s29, 128
          %s318 = scalar_lea.hbm %s4, %s317
          %s320 = sshll.u32 %s297, 4
          %s321 = int_to_ptr.vmem [resolvable:$true] %s320
          %323 = dma.vmem_to_hbm [thread:$0]  %s321, 128, %s318, %s294
        $region52: #{tpu_custom_call.1} parent=31 // pred_fallthru
          _
      $region32: #{tpu_custom_call.1} parent=5 // pred_fallthru
        _
      %p324 = scmp.le.s32.totalorder 2, %s24
      // Predicated region
      $region53: #{tpu_custom_call.1} parent=5 // pred_check
        %p325 = pneg %p324
      $region54: #{tpu_custom_call.1} parent=5 // pred_check_branch
        %327 = sbr.rel (%p325) target = $region56
      $region55: #{tpu_custom_call.1} parent=5 // pred_region
        %s328 = ssub.s32 %s24, 2
        // Predicated region
        $region57: #{tpu_custom_call.1} parent=55 // pred_check
          %p329 = pneg %p126
        $region58: #{tpu_custom_call.1} parent=55 // pred_check_branch
          %331 = sbr.rel (%p329) target = $region60
        $region59: #{tpu_custom_call.1} parent=55 // pred_region
          %s332 = sand.u32 %s111, 1
          %s333 = scalar_lea.sflag [#allocation4], %s332
          %s334 = sand.u32 %s111, 1
          %s335 = smul.addr %s334, 8
          %s336 = scalar_lea.vmem [#allocation9], %s335
          %337 = dma.done %s333, 128
        $region60: #{tpu_custom_call.1} parent=55 // pred_fallthru
          _
        // Predicated region
        $region61: #{tpu_custom_call.1} parent=55 // pred_check
          %p338 = pneg %p152
        $region62: #{tpu_custom_call.1} parent=55 // pred_check_branch
          %340 = sbr.rel (%p338) target = $region64
        $region63: #{tpu_custom_call.1} parent=55 // pred_region
          %s341 = sand.u32 %s137, 1
          %s342 = scalar_lea.sflag [#allocation11], %s341
          %s343 = sand.u32 %s137, 1
          %s344 = smul.addr %s343, 8
          %s345 = scalar_lea.vmem [#allocation10], %s344
          %346 = dma.done %s342, 128
        $region64: #{tpu_custom_call.1} parent=55 // pred_fallthru
          _
      $region56: #{tpu_custom_call.1} parent=5 // pred_fallthru
        _
    $region6: #{tpu_custom_call.1} parent=1 // loop_footer
      %s28 = sadd.s32 1, %s24
    $region7: #{tpu_custom_call.1} parent=1 // loop_footer_branch
      %23 = sbr.rel target = $region3
    $region8: #{tpu_custom_call.1} parent=1 // loop_exit
      _
    %347 = vsyncpa [#allocation3], 1
    %s348 = scalar_lea.sflag [#allocation3], 1
    %349 = vsyncpa %s348, 1
    %350 = vsyncpa [#allocation8], 1
    %s351 = scalar_lea.sflag [#allocation8], 1
    %352 = vsyncpa %s351, 1
    %353 = vsyncpa [#allocation4], 1
    %s354 = scalar_lea.sflag [#allocation4], 1
    %355 = vsyncpa %s354, 1
    %356 = vsyncpa [#allocation11], 1
    %s357 = scalar_lea.sflag [#allocation11], 1
    %358 = vsyncpa %s357, 1
    %359 = vsyncpa [#allocation5], 1
    %s360 = scalar_lea.sflag [#allocation5], 1
    %361 = vsyncpa %s360, 1

</llo_original>
